<compile_context>
chip_gen: v6e
topology: v6e:2x2x1
jax: 0.10.0
libtpu: 0.0.40
codegen_flags: <defaults>
</compile_context>

<pallas_src>
import math
import numpy as np
import jax
import jax.numpy as jnp
from jax.experimental import pallas as pl
from jax.experimental.pallas import tpu as pltpu


# ----------------------------------------------------------------------------
# Reference helpers (glue copied / reformulated from the PyTorch module)
# ----------------------------------------------------------------------------
def bsm(n, d):
    # exact copy of the reference mask builder
    a = [[0] * n for _ in range(n)]
    p = 0
    q = n - 1
    w = int((n + 1) / 2)
    t = 0
    while p < d:
        for i in range(p, q):
            a[p][i] = t
        for i in range(p, q):
            a[i][q] = t
        for i in range(q, p, -1):
            a[q][i] = t
        for i in range(q, p, -1):
            a[i][p] = t
        p += 1
        q -= 1
    while p == d or (p > d and p < q):
        for i in range(p, q):
            a[p][i] = 1
        for i in range(p, q):
            a[i][q] = 1
        for i in range(q, p, -1):
            a[q][i] = 1
        for i in range(q, p, -1):
            a[i][p] = 1
        a[w - 1][w - 1] = 1
        p += 1
        q -= 1
    return np.array(a)


def ncam_kernel_size(c):
    gamma, b = 2, 3
    k = int(abs((math.log(c, 2) + b) / gamma))
    return k if k % 2 else k + 1


def channel_conv_matrix(w, C):
    """Convert Conv2d(1, 1, (2, k), padding=(0,(k-1)//2)) applied to the stacked
    rows [v ; reversed(v)] into an equivalent (C, C) matrix M with out = M @ v."""
    k = w.shape[1]
    pad = (k - 1) // 2
    M = np.zeros((C, C), np.float32)
    for cout in range(C):
        for j in range(k):
            p = cout + j - pad
            if 0 <= p < C:
                M[cout, p] += float(w[0, j])          # row 0: normal order
                M[cout, C - 1 - p] += float(w[1, j])  # row 1: reversed order
    return M


# ----------------------------------------------------------------------------
# Static plan: layouts, offsets, padded sizes
# ----------------------------------------------------------------------------
def _plan(B, C, nout, kh, kw, H, W):
    assert kh % 2 == 1 and kw % 2 == 1, \
        "'same' padding derivation assumes odd depthwise kernel sizes"
    ph, pw = (kh - 1) // 2, (kw - 1) // 2
    Hp, Wp = H + kh - 1, W + kw - 1
    HWp = H * Wp
    LANE = ((HWp + 127) // 128) * 128       # lane-dense output width (>=128 multiple)

    # unique depthwise tap offsets into the flattened padded input
    offs = sorted(set([i * Wp + pw for i in range(kh)]
                      + [ph * Wp + j for j in range(kw)]))
    need = offs[-1] + LANE                  # last lane ever read by a tap slice
    eh = max(0, -(-need // Wp) - Hp)        # extra zero rows padded at the bottom
    L = (Hp + eh) * Wp                      # flattened padded-input lane width

    BC, BN = B * C, B * nout
    R = max(2 * BC, 2 * BN, 4)              # packed-parameter rows

    off, c = {}, 0
    for name, n in (("tap", len(offs)), ("dwb", 1), ("m1", BC), ("m2", BN),
                    ("pw", BC), ("pwb", 1), ("nb", 1), ("pm", LANE)):
        off[name] = c
        c += n
    return dict(B=B, C=C, nout=nout, kh=kh, kw=kw, H=H, W=W, ph=ph, pw=pw,
                Hp=Hp, Wp=Wp, HWp=HWp, LANE=LANE, offs=offs, eh=eh, L=L,
                BC=BC, BN=BN, R=R, ncols=c, off=off)


# ----------------------------------------------------------------------------
# One-time host-side parameter packing (single param DMA per kernel call)
# ----------------------------------------------------------------------------
def _pack(params, d):
    B, C, nout, kh, kw = d["B"], d["C"], d["nout"], d["kh"], d["kw"]
    BC, BN, R, ncols = d["BC"], d["BN"], d["R"], d["ncols"]
    off, offs = d["off"], d["offs"]
    Wp, ph, pw = d["Wp"], d["ph"], d["pw"]
    H, W, HWp = d["H"], d["W"], d["HWp"]

    dwh_w = np.asarray(params["dwh_w"], np.float32)            # (C, kh)
    dww_w = np.asarray(params["dww_w"], np.float32)            # (C, kw)
    dwh_b = np.asarray(params["dwh_b"], np.float32).reshape(C)
    dww_b = np.asarray(params["dww_b"], np.float32).reshape(C)
    pw_w = np.asarray(params["pw_w"], np.float32)              # (nout, C)
    pw_b = np.asarray(params["pw_b"], np.float32).reshape(nout)
    m1a = np.asarray(params["m1a"], np.float32)
    m1b = np.asarray(params["m1b"], np.float32)
    m2a = np.asarray(params["m2a"], np.float32)
    m2b = np.asarray(params["m2b"], np.float32)
    mask = np.asarray(params["mask"], np.float32)

    # fused per-offset depthwise tap weights (center taps of both convs coincide)
    taps = np.zeros((C, len(offs)), np.float32)
    for i in range(kh):
        taps[:, offs.index(i * Wp + pw)] += dwh_w[:, i]
    for j in range(kw):
        taps[:, offs.index(ph * Wp + j)] += dww_w[:, j]

    eyeB = np.eye(B, dtype=np.float32)
    pp = np.zeros((R, ncols), np.float32)
    pp[:BC, off["tap"]:off["tap"] + len(offs)] = np.tile(taps, (B, 1))
    pp[:BC, off["dwb"]] = np.tile(dwh_b + dww_b, B)
    # stacked block-diagonal channel-attention matrices: [conv1d ; conv1d1]
    pp[:2 * BC, off["m1"]:off["m1"] + BC] = np.concatenate(
        [np.kron(eyeB, m1a), np.kron(eyeB, m1b)], axis=0)
    pp[:2 * BN, off["m2"]:off["m2"] + BN] = np.concatenate(
        [np.kron(eyeB, m2a), np.kron(eyeB, m2b)], axis=0)
    pp[:BN, off["pw"]:off["pw"] + BC] = np.kron(eyeB, pw_w)
    pp[:BN, off["pwb"]] = np.tile(pw_b, B)
    pp[0, off["nb"]] = float(np.asarray(params["b1a"]).reshape(()))
    pp[1, off["nb"]] = float(np.asarray(params["b1b"]).reshape(()))
    pp[2, off["nb"]] = float(np.asarray(params["b2a"]).reshape(()))
    pp[3, off["nb"]] = float(np.asarray(params["b2b"]).reshape(()))

    # pooling rows (zero-weighted on wrap/pad lanes, including LANE-HWp extras)
    inv_hw = 1.0 / float(H * W)
    pm_u = np.zeros((H, Wp), np.float32)
    pm_u[:, :W] = inv_hw
    pm_m = np.zeros((H, Wp), np.float32)
    pm_m[:, :W] = mask * inv_hw
    pp[0, off["pm"]:off["pm"] + HWp] = pm_u.reshape(-1)
    pp[1, off["pm"]:off["pm"] + HWp] = pm_m.reshape(-1)
    return jnp.asarray(pp)


# ----------------------------------------------------------------------------
# Pallas kernel: whole LE_DSC2D forward (all batch elements) in one program
# ----------------------------------------------------------------------------
def _make_kernel(d):
    BC, BN, LANE = d["BC"], d["BN"], d["LANE"]
    offs, off = d["offs"], d["off"]
    o_tap, o_dwb = off["tap"], off["dwb"]
    o_m1, o_m2 = off["m1"], off["m2"]
    o_pw, o_pwb, o_nb, o_pm = off["pw"], off["pwb"], off["nb"], off["pm"]

    def kernel(xpf_ref, pp_ref, out_ref):
        xpf = xpf_ref[...]                           # (BC, L) padded input, batch-folded
        pp = pp_ref[...]                             # (R, ncols) packed params + pools

        # ---- fused depthwise (kh,1) + (1,kw) 'same' convs: static lane-offset taps
        acc = pp[:BC, o_dwb:o_dwb + 1]               # combined bias (BC, 1)
        for t, s in enumerate(offs):
            acc = acc + xpf[:, s:s + LANE] * pp[:BC, o_tap + t:o_tap + t + 1]
        out3 = acc                                   # (BC, LANE)

        pm_u = pp[0:1, o_pm:o_pm + LANE]             # uniform mean weights
        pm_m = pp[1:2, o_pm:o_pm + LANE]             # masked  mean weights

        def ncam(xf, n, o_m, b_a, b_b):
            # global average pools: VPU multiply + cross-lane (XLU) reduce
            stat_u = jnp.sum(xf * pm_u, axis=-1, keepdims=True)    # (n, 1)
            stat_m = jnp.sum(xf * pm_m, axis=-1, keepdims=True)    # (n, 1)
            stats = jnp.concatenate([stat_u, stat_m], axis=1)      # (n, 2)
            # one MXU matmul for both channel-attention convs (stacked matrices)
            pre = jnp.dot(pp[:2 * n, o_m:o_m + n], stats,
                          preferred_element_type=jnp.float32)      # (2n, 2)
            s1 = jax.nn.sigmoid(pre[:n, 0:1] + b_a)                # conv1d  on unmasked
            s2 = jax.nn.sigmoid(pre[n:2 * n, 1:2] + b_b)           # conv1d1 on masked
            at = jax.nn.sigmoid((s1 * s2 - 0.2) * 2.0)             # (n, 1)
            return xf * at

        b1a = pp[0:1, o_nb:o_nb + 1]
        b1b = pp[1:2, o_nb:o_nb + 1]
        b2a = pp[2:3, o_nb:o_nb + 1]
        b2b = pp[3:4, o_nb:o_nb + 1]

        out_a = ncam(out3, BC, o_m1, b1a, b1b)       # NCAM2D(nin)

        # pointwise 1x1 conv: one block-diagonal MXU matmul
        y = jnp.dot(pp[:BN, o_pw:o_pw + BC], out_a,
                    preferred_element_type=jnp.float32) + pp[:BN, o_pwb:o_pwb + 1]

        out_b = ncam(y, BN, o_m2, b2a, b2b)          # NCAM2D(nout)
        out_ref[...] = out_b.astype(out_ref.dtype)   # lane-dense (BN, LANE) store

    return kernel


# ----------------------------------------------------------------------------
# Builder: pack once, return a jitted forward for the given input shape
# ----------------------------------------------------------------------------
def make_le_dsc2d(params, x_shape):
    B, C, H, W = map(int, x_shape)
    nout = int(params["pw_w"].shape[0])
    kh = int(params["dwh_w"].shape[1])
    kw = int(params["dww_w"].shape[1])

    d = _plan(B, C, nout, kh, kw, H, W)
    pp = _pack(params, d)                            # one-time host-side packing
    kernel = _make_kernel(d)

    BC, BN, R, ncols = d["BC"], d["BN"], d["R"], d["ncols"]
    L, LANE, HWp, Wp = d["L"], d["LANE"], d["HWp"], d["Wp"]
    ph, pwd, eh = d["ph"], d["pw"], d["eh"]
    n_taps = len(d["offs"])

    flops = (2 * BC * LANE * n_taps                  # depthwise taps
             + 4 * (BC + BN) * LANE                  # global pools (2 per NCAM)
             + 4 * (2 * BC) * BC + 4 * (2 * BN) * BN # channel-attention matmuls
             + 2 * BN * BC * LANE                    # pointwise 1x1 conv
             + 2 * (BC + BN) * LANE)                 # attention scaling
    cost = pl.CostEstimate(
        flops=int(flops),
        transcendentals=int(3 * (BC + BN)),
        bytes_accessed=int(4 * (BC * L + R * ncols + BN * LANE)))

    call = pl.pallas_call(
        kernel,
        out_shape=jax.ShapeDtypeStruct((BN, LANE), jnp.float32),
        grid=(1,),
        in_specs=[
            pl.BlockSpec((BC, L), lambda i: (0, 0)),
            pl.BlockSpec((R, ncols), lambda i: (0, 0)),
        ],
        out_specs=pl.BlockSpec((BN, LANE), lambda i: (0, 0)),
        compiler_params=pltpu.CompilerParams(dimension_semantics=("arbitrary",)),
        cost_estimate=cost,
    )

    @jax.jit
    def forward(x, packed):
        # single pad: spatial 'same' pad + extra zero rows so every tap slice
        # of width LANE stays in-bounds; then fold batch into rows and flatten
        xpf = jnp.pad(x.astype(jnp.float32),
                      ((0, 0), (0, 0), (ph, ph + eh), (pwd, pwd))).reshape(BC, L)
        out_flat = call(xpf, packed)
        # drop the pad lanes / wrap columns and restore NCHW
        return out_flat[:, :HWp].reshape(B, nout, H, Wp)[:, :, :, :W]

    return lambda x: forward(x, pp)


# ----------------------------------------------------------------------------
# Plain-JAX reference (for numerical verification only)
# ----------------------------------------------------------------------------
def reference_forward(x, params):
    B, C, H, W = x.shape
    kh = params["dwh_w"].shape[1]
    kw = params["dww_w"].shape[1]
    ph, pw = (kh - 1) // 2, (kw - 1) // 2
    mask = params["mask"].astype(jnp.float32)

    xph = jnp.pad(x, ((0, 0), (0, 0), (ph, ph), (0, 0)))
    xpw = jnp.pad(x, ((0, 0), (0, 0), (0, 0), (pw, pw)))
    out1 = sum(xph[:, :, i:i + H, :] * params["dwh_w"][None, :, i, None, None]
               for i in range(kh)) + params["dwh_b"][None, :, :, None]
    out2 = sum(xpw[:, :, :, j:j + W] * params["dww_w"][None, :, j, None, None]
               for j in range(kw)) + params["dww_b"][None, :, :, None]
    out3 = out1 + out2

    def ncam(t, m_a, b_a, m_b, b_b):
        mean = jnp.mean(t, axis=(2, 3))
        mmean = jnp.mean(t * mask[None, None, :, :], axis=(2, 3))
        s1 = jax.nn.sigmoid(jnp.einsum("ij,bj->bi", m_a, mean) + b_a[0, 0])
        s2 = jax.nn.sigmoid(jnp.einsum("ij,bj->bi", m_b, mmean) + b_b[0, 0])
        at = jax.nn.sigmoid((s1 * s2 - 0.2) * 2.0)
        return t * at[:, :, None, None]

    out_a = ncam(out3, params["m1a"], params["b1a"], params["m1b"], params["b1b"])
    y = (jnp.einsum("oc,bchw->bohw", params["pw_w"], out_a)
         + params["pw_b"][None, :, :, None])
    return ncam(y, params["m2a"], params["b2a"], params["m2b"], params["b2b"])


# ----------------------------------------------------------------------------
# Deterministic parameter construction (shapes per LE_DSC2D.__init__)
# ----------------------------------------------------------------------------
def init_params(key, nin, nout, kh, kw, patch_size):
    keys = jax.random.split(key, 16)

    def rnd(k, shape, scale=0.2):
        return scale * jax.random.normal(k, shape, jnp.float32)

    k21_1 = ncam_kernel_size(nin)    # NCAM2D(nin)  conv kernel width
    k21_2 = ncam_kernel_size(nout)   # NCAM2D(nout) conv kernel width

    dwh_w = rnd(keys[0], (nin, kh))       # Conv2d(nin,nin,(kh,1),groups=nin)
    dwh_b = rnd(keys[1], (nin, 1))
    dww_w = rnd(keys[2], (nin, kw))       # Conv2d(nin,nin,(1,kw),groups=nin)
    dww_b = rnd(keys[3], (nin, 1))
    pw_w = rnd(keys[4], (nout, nin))      # Conv2d(nin,nout,1)
    pw_b = rnd(keys[5], (nout, 1))

    w1a = np.asarray(rnd(keys[6], (2, k21_1)))
    b1a = rnd(keys[7], (1, 1))
    w1b = np.asarray(rnd(keys[8], (2, k21_1)))
    b1b = rnd(keys[9], (1, 1))
    w2a = np.asarray(rnd(keys[10], (2, k21_2)))
    b2a = rnd(keys[11], (1, 1))
    w2b = np.asarray(rnd(keys[12], (2, k21_2)))
    b2b = rnd(keys[13], (1, 1))

    d = (patch_size - 1) // 2 - 1
    mask = jnp.asarray(bsm(patch_size, d), dtype=jnp.float32)   # (H, W)

    return {
        "dwh_w": dwh_w, "dwh_b": dwh_b, "dww_w": dww_w, "dww_b": dww_b,
        "pw_w": pw_w, "pw_b": pw_b,
        "mask": mask,
        "m1a": jnp.asarray(channel_conv_matrix(w1a, nin)), "b1a": b1a,
        "m1b": jnp.asarray(channel_conv_matrix(w1b, nin)), "b1b": b1b,
        "m2a": jnp.asarray(channel_conv_matrix(w2a, nout)), "b2a": b2a,
        "m2b": jnp.asarray(channel_conv_matrix(w2b, nout)), "b2b": b2b,
    }


if __name__ == "__main__":
    key = jax.random.PRNGKey(0)
    B, nin, nout = 2, 4, 8
    kernel_size_h, kernel_size_w = 3, 3
    patch_size = 9   # ScaleMaskModule requires square spatial dims H == W == patch_size

    kx, kp = jax.random.split(key)
    x = jax.random.normal(kx, (B, nin, patch_size, patch_size), jnp.float32)
    params = init_params(kp, nin, nout, kernel_size_h, kernel_size_w, patch_size)

    fwd = make_le_dsc2d(params, x.shape)     # one-time packing; jitted hot path
    out = jax.block_until_ready(fwd(x))
    assert out.shape == (B, nout, patch_size, patch_size)
    assert bool(jnp.all(jnp.isfinite(out)))

    ref = jax.block_until_ready(reference_forward(x, params))
    assert bool(jnp.allclose(out, ref, rtol=2e-2, atol=2e-2)), \
        f"max abs diff {float(jnp.max(jnp.abs(out - ref)))}"

    print("KERNEL_OK")
</pallas_src>

<mosaic_0001>
module attributes {stable_mosaic.version = 11 : i64} {
  func.func @kernel(%arg0: i32, %arg1: memref<8x154xf32, #tpu.memory_space<vmem>>, %arg2: memref<32x168xf32, #tpu.memory_space<vmem>>, %arg3: memref<16x128xf32, #tpu.memory_space<vmem>>) attributes {dimension_semantics = [#tpu.dimension_semantics<arbitrary>], iteration_bounds = array<i64: 1>, scalar_prefetch = 0 : i64, scratch_operands = 0 : i64, tpu.core_type = #tpu.core_type<tc>, window_params = [{pipeline_mode = #tpu.pipeline_mode<synchronous>, transform_indices = @transform_0, window_bounds = array<i64: 8, 154>}, {pipeline_mode = #tpu.pipeline_mode<synchronous>, transform_indices = @transform_1, window_bounds = array<i64: 32, 168>}, {pipeline_mode = #tpu.pipeline_mode<synchronous>, transform_indices = @transform_2, window_bounds = array<i64: 16, 128>}]} {
    %c0 = arith.constant 0 : index
    %c0_0 = arith.constant 0 : index
    %0 = vector.load %arg1[%c0, %c0_0] : memref<8x154xf32, #tpu.memory_space<vmem>>, vector<8x154xf32>
    %c0_1 = arith.constant 0 : index
    %c0_2 = arith.constant 0 : index
    %1 = vector.load %arg2[%c0_1, %c0_2] : memref<32x168xf32, #tpu.memory_space<vmem>>, vector<32x168xf32>
    %2 = vector.extract_strided_slice %1 {offsets = [0, 5], sizes = [8, 1], strides = [1, 1]} : vector<32x168xf32> to vector<8x1xf32>
    %3 = vector.extract_strided_slice %0 {offsets = [0, 1], sizes = [8, 128], strides = [1, 1]} : vector<8x154xf32> to vector<8x128xf32>
    %4 = vector.extract_strided_slice %1 {offsets = [0, 0], sizes = [8, 1], strides = [1, 1]} : vector<32x168xf32> to vector<8x1xf32>
    %5 = vector.broadcast %4 : vector<8x1xf32> to vector<8x128xf32>
    %6 = arith.mulf %3, %5 : vector<8x128xf32>
    %7 = vector.broadcast %2 : vector<8x1xf32> to vector<8x128xf32>
    %8 = arith.addf %7, %6 : vector<8x128xf32>
    %9 = vector.extract_strided_slice %0 {offsets = [0, 11], sizes = [8, 128], strides = [1, 1]} : vector<8x154xf32> to vector<8x128xf32>
    %10 = vector.extract_strided_slice %1 {offsets = [0, 1], sizes = [8, 1], strides = [1, 1]} : vector<32x168xf32> to vector<8x1xf32>
    %11 = vector.broadcast %10 : vector<8x1xf32> to vector<8x128xf32>
    %12 = arith.mulf %9, %11 : vector<8x128xf32>
    %13 = arith.addf %8, %12 : vector<8x128xf32>
    %14 = vector.extract_strided_slice %0 {offsets = [0, 12], sizes = [8, 128], strides = [1, 1]} : vector<8x154xf32> to vector<8x128xf32>
    %15 = vector.extract_strided_slice %1 {offsets = [0, 2], sizes = [8, 1], strides = [1, 1]} : vector<32x168xf32> to vector<8x1xf32>
    %16 = vector.broadcast %15 : vector<8x1xf32> to vector<8x128xf32>
    %17 = arith.mulf %14, %16 : vector<8x128xf32>
    %18 = arith.addf %13, %17 : vector<8x128xf32>
    %19 = vector.extract_strided_slice %0 {offsets = [0, 13], sizes = [8, 128], strides = [1, 1]} : vector<8x154xf32> to vector<8x128xf32>
    %20 = vector.extract_strided_slice %1 {offsets = [0, 3], sizes = [8, 1], strides = [1, 1]} : vector<32x168xf32> to vector<8x1xf32>
    %21 = vector.broadcast %20 : vector<8x1xf32> to vector<8x128xf32>
    %22 = arith.mulf %19, %21 : vector<8x128xf32>
    %23 = arith.addf %18, %22 : vector<8x128xf32>
    %24 = vector.extract_strided_slice %0 {offsets = [0, 23], sizes = [8, 128], strides = [1, 1]} : vector<8x154xf32> to vector<8x128xf32>
    %25 = vector.extract_strided_slice %1 {offsets = [0, 4], sizes = [8, 1], strides = [1, 1]} : vector<32x168xf32> to vector<8x1xf32>
    %26 = vector.broadcast %25 : vector<8x1xf32> to vector<8x128xf32>
    %27 = arith.mulf %24, %26 : vector<8x128xf32>
    %28 = arith.addf %23, %27 : vector<8x128xf32>
    %29 = vector.extract_strided_slice %1 {offsets = [0, 40], sizes = [1, 128], strides = [1, 1]} : vector<32x168xf32> to vector<1x128xf32>
    %30 = vector.extract_strided_slice %1 {offsets = [1, 40], sizes = [1, 128], strides = [1, 1]} : vector<32x168xf32> to vector<1x128xf32>
    %31 = vector.extract_strided_slice %1 {offsets = [0, 39], sizes = [1, 1], strides = [1, 1]} : vector<32x168xf32> to vector<1x1xf32>
    %32 = vector.extract_strided_slice %1 {offsets = [1, 39], sizes = [1, 1], strides = [1, 1]} : vector<32x168xf32> to vector<1x1xf32>
    %33 = vector.extract_strided_slice %1 {offsets = [2, 39], sizes = [1, 1], strides = [1, 1]} : vector<32x168xf32> to vector<1x1xf32>
    %34 = vector.extract_strided_slice %1 {offsets = [3, 39], sizes = [1, 1], strides = [1, 1]} : vector<32x168xf32> to vector<1x1xf32>
    %35 = vector.broadcast %29 : vector<1x128xf32> to vector<8x128xf32>
    %36 = arith.mulf %28, %35 : vector<8x128xf32>
    %cst = arith.constant dense<0.000000e+00> : vector<8xf32>
    %37 = vector.multi_reduction <add>, %36, %cst [1] : vector<8x128xf32> to vector<8xf32>
    %38 = vector.shape_cast %37 : vector<8xf32> to vector<8x1xf32>
    %39 = vector.broadcast %30 : vector<1x128xf32> to vector<8x128xf32>
    %40 = arith.mulf %28, %39 : vector<8x128xf32>
    %cst_3 = arith.constant dense<0.000000e+00> : vector<8xf32>
    %41 = vector.multi_reduction <add>, %40, %cst_3 [1] : vector<8x128xf32> to vector<8xf32>
    %42 = vector.shape_cast %41 : vector<8xf32> to vector<8x1xf32>
    %43 = tpu.concatenate %38, %42 in 1 : vector<8x1xf32>, vector<8x1xf32> -> vector<8x2xf32>
    %44 = vector.extract_strided_slice %1 {offsets = [0, 6], sizes = [16, 8], strides = [1, 1]} : vector<32x168xf32> to vector<16x8xf32>
    %cst_4 = arith.constant dense<0.000000e+00> : vector<16x2xf32>
    %45 = tpu.matmul %44, %43, %cst_4 {dimension_numbers = #tpu.dot_dimension_numbers<[1], [0], [0], [1], [0, 0, 1, 1], [], []>} : vector<16x8xf32>, vector<8x2xf32>, vector<16x2xf32> -> vector<16x2xf32>
    %46 = vector.extract_strided_slice %45 {offsets = [0, 0], sizes = [8, 1], strides = [1, 1]} : vector<16x2xf32> to vector<8x1xf32>
    %47 = vector.broadcast %31 : vector<1x1xf32> to vector<8x1xf32>
    %48 = arith.addf %46, %47 : vector<8x1xf32>
    %49 = arith.negf %48 : vector<8x1xf32>
    %50 = math.exp %49 : vector<8x1xf32>
    %cst_5 = arith.constant 1.000000e+00 : f32
    %51 = vector.broadcast %cst_5 : f32 to vector<8x1xf32>
    %52 = arith.addf %51, %50 : vector<8x1xf32>
    %53 = arith.divf %51, %52 : vector<8x1xf32>
    %54 = vector.extract_strided_slice %45 {offsets = [8, 1], sizes = [8, 1], strides = [1, 1]} : vector<16x2xf32> to vector<8x1xf32>
    %55 = vector.broadcast %32 : vector<1x1xf32> to vector<8x1xf32>
    %56 = arith.addf %54, %55 : vector<8x1xf32>
    %57 = arith.negf %56 : vector<8x1xf32>
    %58 = math.exp %57 : vector<8x1xf32>
    %cst_6 = arith.constant 1.000000e+00 : f32
    %59 = vector.broadcast %cst_6 : f32 to vector<8x1xf32>
    %60 = arith.addf %59, %58 : vector<8x1xf32>
    %61 = arith.divf %59, %60 : vector<8x1xf32>
    %62 = arith.mulf %53, %61 : vector<8x1xf32>
    %cst_7 = arith.constant 2.000000e-01 : f32
    %63 = vector.broadcast %cst_7 : f32 to vector<8x1xf32>
    %64 = arith.subf %62, %63 : vector<8x1xf32>
    %cst_8 = arith.constant 2.000000e+00 : f32
    %65 = vector.broadcast %cst_8 : f32 to vector<8x1xf32>
    %66 = arith.mulf %64, %65 : vector<8x1xf32>
    %67 = arith.negf %66 : vector<8x1xf32>
    %68 = math.exp %67 : vector<8x1xf32>
    %cst_9 = arith.constant 1.000000e+00 : f32
    %69 = vector.broadcast %cst_9 : f32 to vector<8x1xf32>
    %70 = arith.addf %69, %68 : vector<8x1xf32>
    %71 = arith.divf %69, %70 : vector<8x1xf32>
    %72 = vector.broadcast %71 : vector<8x1xf32> to vector<8x128xf32>
    %73 = arith.mulf %28, %72 : vector<8x128xf32>
    %74 = vector.extract_strided_slice %1 {offsets = [0, 30], sizes = [16, 8], strides = [1, 1]} : vector<32x168xf32> to vector<16x8xf32>
    %cst_10 = arith.constant dense<0.000000e+00> : vector<16x128xf32>
    %75 = tpu.matmul %74, %73, %cst_10 {dimension_numbers = #tpu.dot_dimension_numbers<[1], [0], [0], [1], [0, 0, 1, 1], [], []>} : vector<16x8xf32>, vector<8x128xf32>, vector<16x128xf32> -> vector<16x128xf32>
    %76 = vector.extract_strided_slice %1 {offsets = [0, 38], sizes = [16, 1], strides = [1, 1]} : vector<32x168xf32> to vector<16x1xf32>
    %77 = vector.broadcast %76 : vector<16x1xf32> to vector<16x128xf32>
    %78 = arith.addf %75, %77 : vector<16x128xf32>
    %79 = vector.broadcast %29 : vector<1x128xf32> to vector<16x128xf32>
    %80 = arith.mulf %78, %79 : vector<16x128xf32>
    %cst_11 = arith.constant dense<0.000000e+00> : vector<16xf32>
    %81 = vector.multi_reduction <add>, %80, %cst_11 [1] : vector<16x128xf32> to vector<16xf32>
    %82 = vector.shape_cast %81 : vector<16xf32> to vector<16x1xf32>
    %83 = vector.broadcast %30 : vector<1x128xf32> to vector<16x128xf32>
    %84 = arith.mulf %78, %83 : vector<16x128xf32>
    %cst_12 = arith.constant dense<0.000000e+00> : vector<16xf32>
    %85 = vector.multi_reduction <add>, %84, %cst_12 [1] : vector<16x128xf32> to vector<16xf32>
    %86 = vector.shape_cast %85 : vector<16xf32> to vector<16x1xf32>
    %87 = tpu.concatenate %82, %86 in 1 : vector<16x1xf32>, vector<16x1xf32> -> vector<16x2xf32>
    %88 = vector.extract_strided_slice %1 {offsets = [0, 14], sizes = [32, 16], strides = [1, 1]} : vector<32x168xf32> to vector<32x16xf32>
    %cst_13 = arith.constant dense<0.000000e+00> : vector<32x2xf32>
    %89 = tpu.matmul %88, %87, %cst_13 {dimension_numbers = #tpu.dot_dimension_numbers<[1], [0], [0], [1], [0, 0, 1, 1], [], []>} : vector<32x16xf32>, vector<16x2xf32>, vector<32x2xf32> -> vector<32x2xf32>
    %90 = vector.extract_strided_slice %89 {offsets = [0, 0], sizes = [16, 1], strides = [1, 1]} : vector<32x2xf32> to vector<16x1xf32>
    %91 = vector.broadcast %33 : vector<1x1xf32> to vector<16x1xf32>
    %92 = arith.addf %90, %91 : vector<16x1xf32>
    %93 = arith.negf %92 : vector<16x1xf32>
    %94 = math.exp %93 : vector<16x1xf32>
    %cst_14 = arith.constant 1.000000e+00 : f32
    %95 = vector.broadcast %cst_14 : f32 to vector<16x1xf32>
    %96 = arith.addf %95, %94 : vector<16x1xf32>
    %97 = arith.divf %95, %96 : vector<16x1xf32>
    %98 = vector.extract_strided_slice %89 {offsets = [16, 1], sizes = [16, 1], strides = [1, 1]} : vector<32x2xf32> to vector<16x1xf32>
    %99 = vector.broadcast %34 : vector<1x1xf32> to vector<16x1xf32>
    %100 = arith.addf %98, %99 : vector<16x1xf32>
    %101 = arith.negf %100 : vector<16x1xf32>
    %102 = math.exp %101 : vector<16x1xf32>
    %cst_15 = arith.constant 1.000000e+00 : f32
    %103 = vector.broadcast %cst_15 : f32 to vector<16x1xf32>
    %104 = arith.addf %103, %102 : vector<16x1xf32>
    %105 = arith.divf %103, %104 : vector<16x1xf32>
    %106 = arith.mulf %97, %105 : vector<16x1xf32>
    %cst_16 = arith.constant 2.000000e-01 : f32
    %107 = vector.broadcast %cst_16 : f32 to vector<16x1xf32>
    %108 = arith.subf %106, %107 : vector<16x1xf32>
    %cst_17 = arith.constant 2.000000e+00 : f32
    %109 = vector.broadcast %cst_17 : f32 to vector<16x1xf32>
    %110 = arith.mulf %108, %109 : vector<16x1xf32>
    %111 = arith.negf %110 : vector<16x1xf32>
    %112 = math.exp %111 : vector<16x1xf32>
    %cst_18 = arith.constant 1.000000e+00 : f32
    %113 = vector.broadcast %cst_18 : f32 to vector<16x1xf32>
    %114 = arith.addf %113, %112 : vector<16x1xf32>
    %115 = arith.divf %113, %114 : vector<16x1xf32>
    %116 = vector.broadcast %115 : vector<16x1xf32> to vector<16x128xf32>
    %117 = arith.mulf %78, %116 : vector<16x128xf32>
    %c0_19 = arith.constant 0 : index
    %c0_20 = arith.constant 0 : index
    %118 = vector.load %arg3[%c0_19, %c0_20] : memref<16x128xf32, #tpu.memory_space<vmem>>, vector<16x128xf32>
    tpu.vector_store %arg3[%c0_19, %c0_20], %117 {strides = array<i32>} : memref<16x128xf32, #tpu.memory_space<vmem>>, vector<16x128xf32>,
    return
  }
  func.func @transform_0(%arg0: i32) -> (i32, i32) {
    %c0_i32 = arith.constant 0 : i32
    %c0_i32_0 = arith.constant 0 : i32
    %c0_i32_1 = arith.constant 0 : i32
    return %c0_i32, %c0_i32_0 : i32, i32
  }
  func.func @transform_1(%arg0: i32) -> (i32, i32) {
    %c0_i32 = arith.constant 0 : i32
    %c0_i32_0 = arith.constant 0 : i32
    %c0_i32_1 = arith.constant 0 : i32
    return %c0_i32, %c0_i32_0 : i32, i32
  }
  func.func @transform_2(%arg0: i32) -> (i32, i32) {
    %c0_i32 = arith.constant 0 : i32
    %c0_i32_0 = arith.constant 0 : i32
    %c0_i32_1 = arith.constant 0 : i32
    return %c0_i32, %c0_i32_0 : i32, i32
  }
}

</mosaic_0001>

<llo_original>
// kernel: forward.1
$region0: #{forward.1}
  #allocation0 [shape = 'u32[]', space=smem, size = 0x4, offset = 0x4, fixed_abs, tag = 'smem constant byte address 0x4 - core index']
  #allocation1 [shape = 'u32[144,128]{1,0:T(1,128)}', space=vmem, size = 0x12000, scoped, tag = 'internal scratch']
  %s0 = inlined_call_operand.vmem [shape: f32[8,154], index: 0, kind: input, shape index: {}]
  %s1 = inlined_call_operand.vmem [shape: f32[32,168], index: 1, kind: input, shape index: {}]
  %s2 = inlined_call_operand.vmem [shape: f32[16,128], index: 2, kind: output, shape index: {}]
  %s3 = sld [smem:[#allocation0]]
  $region18: #{forward.1} parent=0
    _
  %s5 = ssub.s32 1, %s3
  %s6 = scalar_select 0, %s5, %s3
  // Predicated region
  $region2: #{forward.1} parent=0 // pred_check
    _
  $region3: #{forward.1} parent=0 // pred_check_branch
    %8 = sbr.rel (0) target = $region5
  $region4: #{forward.1} parent=0 // pred_region
    _
  $region5: #{forward.1} parent=0 // pred_fallthru
    _
  // Predicated region
  $region6: #{forward.1} parent=0 // pred_check
    _
  $region7: #{forward.1} parent=0 // pred_check_branch
    %10 = sbr.rel (0) target = $region9
  $region8: #{forward.1} parent=0 // pred_region
    _
  $region9: #{forward.1} parent=0 // pred_fallthru
    _
  %v11 = vld [vmem:[%s0] sm:$0xff]
  %v12 = vld [vmem:[%s0 + $0x8] sm:$0xff]
  %v13 = vld [vmem:[%s1] sm:$0xff]
  %v14 = vld [vmem:[%s1 + $0x8] sm:$0xff]
  %v15 = vld [vmem:[%s1 + $0x10] sm:$0xff]
  %v16 = vld [vmem:[%s1 + $0x20] sm:$0xff]
  %v17 = vld [vmem:[%s1 + $0x30] sm:$0xff]
  %19 = vset.pattern.permute.xlu0 0
  %20 = vperm.xlu0 %19, %v13
  %v21 = vpop.permute.xlu0 %20
  %v23 = vmul.f32 %v11, %v21
  %v24 = vmul.f32 %v12, %v21
  %25 = vset.pattern.permute.xlu0 5
  %26 = vperm.xlu0 %25, %v13
  %v27 = vpop.permute.xlu0 %26
  %v29 = vadd.f32 %v27, %v23
  %v30 = vadd.f32 %v27, %v24
  %31 = vset.pattern.permute.xlu0 1
  %32 = vperm.xlu0 %31, %v13
  %v33 = vpop.permute.xlu0 %32
  %v35 = vmul.f32 %v11, %v33
  %v36 = vmul.f32 %v12, %v33
  %39 = vrot.lane.b32.xlu0 %v35, 118
  %v40 = vpop.permute.xlu0 %39
  %41 = vrot.lane.b32.xlu0 %v36, 118
  %v42 = vpop.permute.xlu0 %41
  %vm43 = vcmask 965632
  %v44 = vsel %vm43, %v40, %v42
  %v47 = vadd.f32 %v29, %v44
  %v48 = vadd.f32 %v30, %v42
  %49 = vset.pattern.permute.xlu0 2
  %50 = vperm.xlu0 %49, %v13
  %v51 = vpop.permute.xlu0 %50
  %v53 = vmul.f32 %v11, %v51
  %v54 = vmul.f32 %v12, %v51
  %57 = vrot.lane.b32.xlu0 %v53, 117
  %v58 = vpop.permute.xlu0 %57
  %59 = vrot.lane.b32.xlu0 %v54, 117
  %v60 = vpop.permute.xlu0 %59
  %vm61 = vcmask 957440
  %v62 = vsel %vm61, %v58, %v60
  %v65 = vadd.f32 %v47, %v62
  %v66 = vadd.f32 %v48, %v60
  %67 = vset.pattern.permute.xlu0 3
  %68 = vperm.xlu0 %67, %v13
  %v69 = vpop.permute.xlu0 %68
  %v71 = vmul.f32 %v11, %v69
  %v72 = vmul.f32 %v12, %v69
  %75 = vrot.lane.b32.xlu0 %v71, 116
  %v76 = vpop.permute.xlu0 %75
  %77 = vrot.lane.b32.xlu0 %v72, 116
  %v78 = vpop.permute.xlu0 %77
  %vm79 = vcmask 949248
  %v80 = vsel %vm79, %v76, %v78
  %v83 = vadd.f32 %v65, %v80
  %v84 = vadd.f32 %v66, %v78
  %85 = vset.pattern.permute.xlu0 4
  %86 = vperm.xlu0 %85, %v13
  %v87 = vpop.permute.xlu0 %86
  %v89 = vmul.f32 %v11, %v87
  %v90 = vmul.f32 %v12, %v87
  %93 = vrot.lane.b32.xlu0 %v89, 106
  %v94 = vpop.permute.xlu0 %93
  %95 = vrot.lane.b32.xlu0 %v90, 106
  %v96 = vpop.permute.xlu0 %95
  %vm97 = vcmask 867328
  %v98 = vsel %vm97, %v94, %v96
  %v101 = vadd.f32 %v83, %v98
  %v102 = vadd.f32 %v84, %v96
  %v103 = vlaneseq
  %v104 = vshrl.u32 %v103, 7
  %v105 = vsub.s32 0, %v104
  %v106 = vrot.slane %v13, %v105
  %v107 = vlaneseq
  %v108 = vshrl.u32 %v107, 7
  %v109 = vsub.s32 0, %v108
  %v110 = vrot.slane %v14, %v109
  %113 = vrot.lane.b32.xlu0 %v106, 89
  %v114 = vpop.permute.xlu0 %113
  %115 = vrot.lane.b32.xlu0 %v110, 89
  %v116 = vpop.permute.xlu0 %115
  %vm117 = vcmask 728064
  %v118 = vsel %vm117, %v114, %v116
  %v121 = vmul.f32 %v101, %v118
  %v122 = vmul.f32 %v102, %v116
  %125 = vrot.lane.b32.xlu0 %v121, 127
  %v126 = vpop.permute.xlu0 %125
  %127 = vrot.lane.b32.xlu0 %v122, 127
  %v128 = vpop.permute.xlu0 %127
  %vm129 = vcmask 1039360
  %v130 = vsel %vm129, %v126, %v128
  %132 = vadd.xlane.f32.xlu0 %v130
  %v133 = vpop.xlane.xlu0 %132
  %v134 = vlaneseq
  %v135 = vshrl.u32 %v134, 7
  %v136 = vsub.s32 1, %v135
  %v137 = vrot.slane %v13, %v136
  %v138 = vlaneseq
  %v139 = vshrl.u32 %v138, 7
  %v140 = vsub.s32 1, %v139
  %v141 = vrot.slane %v14, %v140
  %144 = vrot.lane.b32.xlu0 %v137, 89
  %v145 = vpop.permute.xlu0 %144
  %146 = vrot.lane.b32.xlu0 %v141, 89
  %v147 = vpop.permute.xlu0 %146
  %v148 = vsel %vm117, %v145, %v147
  %v151 = vmul.f32 %v101, %v148
  %v152 = vmul.f32 %v102, %v147
  %155 = vrot.lane.b32.xlu0 %v151, 127
  %v156 = vpop.permute.xlu0 %155
  %157 = vrot.lane.b32.xlu0 %v152, 127
  %v158 = vpop.permute.xlu0 %157
  %v159 = vsel %vm129, %v156, %v158
  %161 = vadd.xlane.f32.xlu0 %v159
  %v162 = vpop.xlane.xlu0 %161
  %vm163 = vcmask 7168
  %v164 = vsel %vm163, %v133, %v162
  %166 = vrot.lane.b32.xlu0 %v13, 122
  %v167 = vpop.permute.xlu0 %166
  %168 = vrot.lane.b32.xlu0 %v15, 122
  %v169 = vpop.permute.xlu0 %168
  %vm170 = vcmask 64512
  %v171 = vsel %vm170, %v167, 0
  %v173 = vsel %vm170, %v169, 0
  %175 = vmatprep.subr.mxu0 0.0
  %176 = vmatpush1.msra.mxu0 0.0
  %177 = vmatprep.subr.mxu0 0.0
  %178 = vmatpush1.msra.mxu0 0.0
  %179 = vmatprep.subr.mxu0 0.0
  %180 = vmatpush1.msra.mxu0 0.0
  %181 = vmatprep.subr.mxu0 0.0
  %182 = vmatpush1.msra.mxu0 0.0
  %183 = vmatprep.subr.mxu0 0.0
  %184 = vmatpush1.msra.mxu0 0.0
  %185 = vmatprep.subr.mxu0 0.0
  %186 = vmatpush1.msra.mxu0 0.0
  %187 = vmatprep.subr.mxu0 0.0
  %188 = vmatpush1.msra.mxu0 0.0
  %189 = vmatprep.subr.mxu0 0.0
  %190 = vmatpush1.msra.mxu0 0.0
  %191 = vmatprep.subr.mxu0 0.0
  %192 = vmatpush1.msra.mxu0 0.0
  %193 = vmatprep.subr.mxu0 0.0
  %194 = vmatpush1.msra.mxu0 0.0
  %195 = vmatprep.subr.mxu0 0.0
  %196 = vmatpush1.msra.mxu0 0.0
  %197 = vmatprep.subr.mxu0 0.0
  %198 = vmatpush1.msra.mxu0 0.0
  %199 = vmatprep.subr.mxu0 0.0
  %200 = vmatpush1.msra.mxu0 0.0
  %201 = vmatprep.subr.mxu0 0.0
  %202 = vmatpush1.msra.mxu0 0.0
  %203 = vmatprep.subr.mxu0 0.0
  %204 = vmatpush1.msra.mxu0 0.0
  %205 = vmatprep.subr.mxu0 0.0
  %206 = vmatpush1.msra.mxu0 %v164
  %207 = vmatprep.subr.mxu0 0.0
  %208 = vmatpush2.msra.mxu0 0.0
  %209 = vmatprep.subr.mxu0 0.0
  %210 = vmatpush2.msra.mxu0 0.0
  %211 = vmatprep.subr.mxu0 0.0
  %212 = vmatpush2.msra.mxu0 0.0
  %213 = vmatprep.subr.mxu0 0.0
  %214 = vmatpush2.msra.mxu0 0.0
  %215 = vmatprep.subr.mxu0 0.0
  %216 = vmatpush2.msra.mxu0 0.0
  %217 = vmatprep.subr.mxu0 0.0
  %218 = vmatpush2.msra.mxu0 0.0
  %219 = vmatprep.subr.mxu0 0.0
  %220 = vmatpush2.msra.mxu0 0.0
  %221 = vmatprep.subr.mxu0 0.0
  %222 = vmatpush2.msra.mxu0 0.0
  %223 = vmatprep.subr.mxu0 0.0
  %224 = vmatpush2.msra.mxu0 0.0
  %225 = vmatprep.subr.mxu0 0.0
  %226 = vmatpush2.msra.mxu0 0.0
  %227 = vmatprep.subr.mxu0 0.0
  %228 = vmatpush2.msra.mxu0 0.0
  %229 = vmatprep.subr.mxu0 0.0
  %230 = vmatpush2.msra.mxu0 0.0
  %231 = vmatprep.subr.mxu0 0.0
  %232 = vmatpush2.msra.mxu0 0.0
  %233 = vmatprep.subr.mxu0 0.0
  %234 = vmatpush2.msra.mxu0 0.0
  %235 = vmatprep.subr.mxu0 0.0
  %236 = vmatpush2.msra.mxu0 0.0
  %237 = vmatprep.subr.mxu0 0.0
  %238 = vmatpush2.msra.mxu0 0.0
  %239 = vmatprep.mubr.f32.mxu0 0.0
  %240 = vmatmul.mubr.f32.gmra.mxu0 %v171
  %v241 = vpop.f32.mrf.mxu0
  %v242 = vadd.f32 0.0, %v241
  %v243 = vpop.f32.mrf.mxu0
  %244 = vmatprep.mubr.f32.mxu0 0.0
  %245 = vmatmul.mubr.f32.gmra.mxu0 %v173
  %v246 = vpop.f32.mrf.mxu0
  %v247 = vadd.f32 0.0, %v246
  %v248 = vpop.f32.mrf.mxu0
  %249 = vdwg.mxu0
  %v251 = vadd.f32 %v242, %v114
  %v252 = vxor.u32 %v251, 2147483648
  %v253 = vmul.f32 %v252, 1.442695
  %v254 = vpow.pop %v253
  %v255 = vadd.f32 %v254, 1.0
  %v256 = vrcp.pop %v255
  %v257 = vmul.f32 1.0, %v256
  %258 = vrot.lane.b32.xlu0 %v137, 90
  %v259 = vpop.permute.xlu0 %258
  %v261 = vadd.f32 %v247, %v259
  %v262 = vxor.u32 %v261, 2147483648
  %v263 = vmul.f32 %v262, 1.442695
  %v264 = vpow.pop %v263
  %v265 = vadd.f32 %v264, 1.0
  %v266 = vrcp.pop %v265
  %v267 = vmul.f32 1.0, %v266
  %269 = vrot.lane.b32.xlu0 %v267, 127
  %v270 = vpop.permute.xlu0 %269
  %v272 = vmul.f32 %v257, %v270
  %v273 = vsub.f32 %v272, 0.2
  %v274 = vmul.f32 %v273, 2.0
  %v275 = vxor.u32 %v274, 2147483648
  %v276 = vmul.f32 %v275, 1.442695
  %v277 = vpow.pop %v276
  %v278 = vadd.f32 %v277, 1.0
  %v279 = vrcp.pop %v278
  %v280 = vmul.f32 1.0, %v279
  %282 = vset.pattern.permute.xlu0 0
  %283 = vperm.xlu0 %282, %v280
  %v284 = vpop.permute.xlu0 %283
  %v286 = vmul.f32 %v101, %v284
  %v287 = vmul.f32 %v102, %v284
  %288 = vset.pattern.permute.xlu0 38
  %289 = vperm.xlu0 %288, %v13
  %v290 = vpop.permute.xlu0 %289
  %292 = vset.pattern.permute.xlu0 38
  %293 = vperm.xlu0 %292, %v15
  %v294 = vpop.permute.xlu0 %293
  %296 = vrot.lane.b32.xlu0 %v13, 98
  %v297 = vpop.permute.xlu0 %296
  %298 = vrot.lane.b32.xlu0 %v15, 98
  %v299 = vpop.permute.xlu0 %298
  %302 = vrot.lane.b32.xlu0 %v286, 127
  %v303 = vpop.permute.xlu0 %302
  %304 = vrot.lane.b32.xlu0 %v287, 127
  %v305 = vpop.permute.xlu0 %304
  %v306 = vsel %vm129, %v303, %v305
  %v308 = vsel %vm170, %v297, 0
  %v310 = vsel %vm170, %v299, 0
  %312 = vmatprep.subr.mxu0 0.0
  %313 = vmatpush1.msra.mxu0 0.0
  %314 = vmatprep.subr.mxu0 0.0
  %315 = vmatpush1.msra.mxu0 0.0
  %316 = vmatprep.subr.mxu0 0.0
  %317 = vmatpush1.msra.mxu0 0.0
  %318 = vmatprep.subr.mxu0 0.0
  %319 = vmatpush1.msra.mxu0 0.0
  %320 = vmatprep.subr.mxu0 0.0
  %321 = vmatpush1.msra.mxu0 0.0
  %322 = vmatprep.subr.mxu0 0.0
  %323 = vmatpush1.msra.mxu0 0.0
  %324 = vmatprep.subr.mxu0 0.0
  %325 = vmatpush1.msra.mxu0 0.0
  %326 = vmatprep.subr.mxu0 0.0
  %327 = vmatpush1.msra.mxu0 0.0
  %328 = vmatprep.subr.mxu0 0.0
  %329 = vmatpush1.msra.mxu0 0.0
  %330 = vmatprep.subr.mxu0 0.0
  %331 = vmatpush1.msra.mxu0 0.0
  %332 = vmatprep.subr.mxu0 0.0
  %333 = vmatpush1.msra.mxu0 0.0
  %334 = vmatprep.subr.mxu0 0.0
  %335 = vmatpush1.msra.mxu0 0.0
  %336 = vmatprep.subr.mxu0 0.0
  %337 = vmatpush1.msra.mxu0 0.0
  %338 = vmatprep.subr.mxu0 0.0
  %339 = vmatpush1.msra.mxu0 0.0
  %340 = vmatprep.subr.mxu0 0.0
  %341 = vmatpush1.msra.mxu0 0.0
  %342 = vmatprep.subr.mxu0 0.0
  %343 = vmatpush1.msra.mxu0 %v306
  %344 = vmatprep.subr.mxu0 0.0
  %345 = vmatpush2.msra.mxu0 0.0
  %346 = vmatprep.subr.mxu0 0.0
  %347 = vmatpush2.msra.mxu0 0.0
  %348 = vmatprep.subr.mxu0 0.0
  %349 = vmatpush2.msra.mxu0 0.0
  %350 = vmatprep.subr.mxu0 0.0
  %351 = vmatpush2.msra.mxu0 0.0
  %352 = vmatprep.subr.mxu0 0.0
  %353 = vmatpush2.msra.mxu0 0.0
  %354 = vmatprep.subr.mxu0 0.0
  %355 = vmatpush2.msra.mxu0 0.0
  %356 = vmatprep.subr.mxu0 0.0
  %357 = vmatpush2.msra.mxu0 0.0
  %358 = vmatprep.subr.mxu0 0.0
  %359 = vmatpush2.msra.mxu0 0.0
  %360 = vmatprep.subr.mxu0 0.0
  %361 = vmatpush2.msra.mxu0 0.0
  %362 = vmatprep.subr.mxu0 0.0
  %363 = vmatpush2.msra.mxu0 0.0
  %364 = vmatprep.subr.mxu0 0.0
  %365 = vmatpush2.msra.mxu0 0.0
  %366 = vmatprep.subr.mxu0 0.0
  %367 = vmatpush2.msra.mxu0 0.0
  %368 = vmatprep.subr.mxu0 0.0
  %369 = vmatpush2.msra.mxu0 0.0
  %370 = vmatprep.subr.mxu0 0.0
  %371 = vmatpush2.msra.mxu0 0.0
  %372 = vmatprep.subr.mxu0 0.0
  %373 = vmatpush2.msra.mxu0 0.0
  %374 = vmatprep.subr.mxu0 0.0
  %375 = vmatpush2.msra.mxu0 0.0
  %376 = vmatprep.mubr.f32.mxu0 0.0
  %377 = vmatmul.mubr.f32.gmra.mxu0 %v308
  %v378 = vpop.f32.mrf.mxu0
  %v379 = vadd.f32 %v290, %v378
  %v380 = vpop.f32.mrf.mxu0
  %381 = vmatprep.mubr.f32.mxu0 0.0
  %382 = vmatmul.mubr.f32.gmra.mxu0 %v310
  %v383 = vpop.f32.mrf.mxu0
  %v384 = vadd.f32 %v294, %v383
  %v385 = vpop.f32.mrf.mxu0
  %386 = vdwg.mxu0
  %387 = vrot.lane.b32.xlu0 %v106, 88
  %v388 = vpop.permute.xlu0 %387
  %389 = vrot.lane.b32.xlu0 %v110, 88
  %v390 = vpop.permute.xlu0 %389
  %vm391 = vcmask 719872
  %v392 = vsel %vm391, %v388, %v390
  %v394 = vmul.f32 %v379, %v392
  %v395 = vmul.f32 %v384, %v392
  %396 = vadd.xlane.f32.xlu0 %v394
  %v397 = vpop.xlane.xlu0 %396
  %398 = vadd.xlane.f32.xlu0 %v395
  %v399 = vpop.xlane.xlu0 %398
  %400 = vrot.lane.b32.xlu0 %v137, 88
  %v401 = vpop.permute.xlu0 %400
  %402 = vrot.lane.b32.xlu0 %v141, 88
  %v403 = vpop.permute.xlu0 %402
  %v404 = vsel %vm391, %v401, %v403
  %v406 = vmul.f32 %v379, %v404
  %v407 = vmul.f32 %v384, %v404
  %408 = vadd.xlane.f32.xlu0 %v406
  %v409 = vpop.xlane.xlu0 %408
  %410 = vadd.xlane.f32.xlu0 %v407
  %v411 = vpop.xlane.xlu0 %410
  %v412 = vsel %vm163, %v397, %v409
  %v413 = vsel %vm163, %v399, %v411
  %416 = vrot.lane.b32.xlu0 %v13, 114
  %v417 = vpop.permute.xlu0 %416
  %418 = vrot.lane.b32.xlu0 %v15, 114
  %v419 = vpop.permute.xlu0 %418
  %420 = vrot.lane.b32.xlu0 %v16, 114
  %v421 = vpop.permute.xlu0 %420
  %422 = vrot.lane.b32.xlu0 %v17, 114
  %v423 = vpop.permute.xlu0 %422
  %vm424 = vcmask 130048
  %v425 = vsel %vm424, %v417, 0
  %v427 = vsel %vm424, %v419, 0
  %v429 = vsel %vm424, %v421, 0
  %v431 = vsel %vm424, %v423, 0
  %433 = vmatprep.subr.mxu0 0.0
  %434 = vmatpush1.msra.mxu0 0.0
  %435 = vmatprep.subr.mxu0 0.0
  %436 = vmatpush1.msra.mxu0 0.0
  %437 = vmatprep.subr.mxu0 0.0
  %438 = vmatpush1.msra.mxu0 0.0
  %439 = vmatprep.subr.mxu0 0.0
  %440 = vmatpush1.msra.mxu0 0.0
  %441 = vmatprep.subr.mxu0 0.0
  %442 = vmatpush1.msra.mxu0 0.0
  %443 = vmatprep.subr.mxu0 0.0
  %444 = vmatpush1.msra.mxu0 0.0
  %445 = vmatprep.subr.mxu0 0.0
  %446 = vmatpush1.msra.mxu0 0.0
  %447 = vmatprep.subr.mxu0 0.0
  %448 = vmatpush1.msra.mxu0 0.0
  %449 = vmatprep.subr.mxu0 0.0
  %450 = vmatpush1.msra.mxu0 0.0
  %451 = vmatprep.subr.mxu0 0.0
  %452 = vmatpush1.msra.mxu0 0.0
  %453 = vmatprep.subr.mxu0 0.0
  %454 = vmatpush1.msra.mxu0 0.0
  %455 = vmatprep.subr.mxu0 0.0
  %456 = vmatpush1.msra.mxu0 0.0
  %457 = vmatprep.subr.mxu0 0.0
  %458 = vmatpush1.msra.mxu0 0.0
  %459 = vmatprep.subr.mxu0 0.0
  %460 = vmatpush1.msra.mxu0 0.0
  %461 = vmatprep.subr.mxu0 0.0
  %462 = vmatpush1.msra.mxu0 %v413
  %463 = vmatprep.subr.mxu0 0.0
  %464 = vmatpush1.msra.mxu0 %v412
  %465 = vmatprep.subr.mxu0 0.0
  %466 = vmatpush2.msra.mxu0 0.0
  %467 = vmatprep.subr.mxu0 0.0
  %468 = vmatpush2.msra.mxu0 0.0
  %469 = vmatprep.subr.mxu0 0.0
  %470 = vmatpush2.msra.mxu0 0.0
  %471 = vmatprep.subr.mxu0 0.0
  %472 = vmatpush2.msra.mxu0 0.0
  %473 = vmatprep.subr.mxu0 0.0
  %474 = vmatpush2.msra.mxu0 0.0
  %475 = vmatprep.subr.mxu0 0.0
  %476 = vmatpush2.msra.mxu0 0.0
  %477 = vmatprep.subr.mxu0 0.0
  %478 = vmatpush2.msra.mxu0 0.0
  %479 = vmatprep.subr.mxu0 0.0
  %480 = vmatpush2.msra.mxu0 0.0
  %481 = vmatprep.subr.mxu0 0.0
  %482 = vmatpush2.msra.mxu0 0.0
  %483 = vmatprep.subr.mxu0 0.0
  %484 = vmatpush2.msra.mxu0 0.0
  %485 = vmatprep.subr.mxu0 0.0
  %486 = vmatpush2.msra.mxu0 0.0
  %487 = vmatprep.subr.mxu0 0.0
  %488 = vmatpush2.msra.mxu0 0.0
  %489 = vmatprep.subr.mxu0 0.0
  %490 = vmatpush2.msra.mxu0 0.0
  %491 = vmatprep.subr.mxu0 0.0
  %492 = vmatpush2.msra.mxu0 0.0
  %493 = vmatprep.subr.mxu0 0.0
  %494 = vmatpush2.msra.mxu0 0.0
  %495 = vmatprep.subr.mxu0 0.0
  %496 = vmatpush2.msra.mxu0 0.0
  %497 = vmatprep.mubr.f32.mxu0 0.0
  %498 = vmatmul.mubr.f32.gmra.mxu0 %v425
  %v499 = vpop.f32.mrf.mxu0
  %v500 = vadd.f32 0.0, %v499
  %v501 = vpop.f32.mrf.mxu0
  %502 = vmatprep.mubr.f32.mxu0 0.0
  %503 = vmatmul.mubr.f32.gmra.mxu0 %v427
  %v504 = vpop.f32.mrf.mxu0
  %v505 = vadd.f32 0.0, %v504
  %v506 = vpop.f32.mrf.mxu0
  %507 = vmatprep.mubr.f32.mxu0 0.0
  %508 = vmatmul.mubr.f32.gmra.mxu0 %v429
  %v509 = vpop.f32.mrf.mxu0
  %v510 = vadd.f32 0.0, %v509
  %v511 = vpop.f32.mrf.mxu0
  %512 = vmatprep.mubr.f32.mxu0 0.0
  %513 = vmatmul.mubr.f32.gmra.mxu0 %v431
  %v514 = vpop.f32.mrf.mxu0
  %v515 = vadd.f32 0.0, %v514
  %v516 = vpop.f32.mrf.mxu0
  %517 = vdwg.mxu0
  %v518 = vlaneseq
  %v519 = vshrl.u32 %v518, 7
  %v520 = vsub.s32 2, %v519
  %v521 = vrot.slane %v13, %v520
  %523 = vrot.lane.b32.xlu0 %v521, 89
  %v524 = vpop.permute.xlu0 %523
  %v526 = vadd.f32 %v500, %v524
  %v527 = vadd.f32 %v505, %v524
  %v528 = vxor.u32 %v526, 2147483648
  %v529 = vxor.u32 %v527, 2147483648
  %v530 = vmul.f32 %v528, 1.442695
  %v531 = vpow.pop %v530
  %v532 = vmul.f32 %v529, 1.442695
  %v533 = vpow.pop %v532
  %v534 = vadd.f32 %v531, 1.0
  %v535 = vadd.f32 %v533, 1.0
  %v536 = vrcp.pop %v534
  %v537 = vmul.f32 1.0, %v536
  %v538 = vrcp.pop %v535
  %v539 = vmul.f32 1.0, %v538
  %v540 = vlaneseq
  %v541 = vshrl.u32 %v540, 7
  %v542 = vsub.s32 3, %v541
  %v543 = vrot.slane %v13, %v542
  %545 = vrot.lane.b32.xlu0 %v543, 90
  %v546 = vpop.permute.xlu0 %545
  %v548 = vadd.f32 %v510, %v546
  %v549 = vadd.f32 %v515, %v546
  %v550 = vxor.u32 %v548, 2147483648
  %v551 = vxor.u32 %v549, 2147483648
  %v552 = vmul.f32 %v550, 1.442695
  %v553 = vpow.pop %v552
  %v554 = vmul.f32 %v551, 1.442695
  %v555 = vpow.pop %v554
  %v556 = vadd.f32 %v553, 1.0
  %v557 = vadd.f32 %v555, 1.0
  %v558 = vrcp.pop %v556
  %v559 = vmul.f32 1.0, %v558
  %v560 = vrcp.pop %v557
  %v561 = vmul.f32 1.0, %v560
  %564 = vrot.lane.b32.xlu0 %v559, 127
  %v565 = vpop.permute.xlu0 %564
  %566 = vrot.lane.b32.xlu0 %v561, 127
  %v567 = vpop.permute.xlu0 %566
  %v570 = vmul.f32 %v537, %v565
  %v571 = vmul.f32 %v539, %v567
  %v572 = vsub.f32 %v570, 0.2
  %v573 = vsub.f32 %v571, 0.2
  %v574 = vmul.f32 %v572, 2.0
  %v575 = vmul.f32 %v573, 2.0
  %v576 = vxor.u32 %v574, 2147483648
  %v577 = vxor.u32 %v575, 2147483648
  %v578 = vmul.f32 %v576, 1.442695
  %v579 = vpow.pop %v578
  %v580 = vmul.f32 %v577, 1.442695
  %v581 = vpow.pop %v580
  %v582 = vadd.f32 %v579, 1.0
  %v583 = vadd.f32 %v581, 1.0
  %v584 = vrcp.pop %v582
  %v585 = vmul.f32 1.0, %v584
  %v586 = vrcp.pop %v583
  %v587 = vmul.f32 1.0, %v586
  %589 = vset.pattern.permute.xlu0 0
  %590 = vperm.xlu0 %589, %v585
  %v591 = vpop.permute.xlu0 %590
  %594 = vset.pattern.permute.xlu0 0
  %595 = vperm.xlu0 %594, %v587
  %v596 = vpop.permute.xlu0 %595
  %v598 = vmul.f32 %v379, %v591
  %v599 = vmul.f32 %v384, %v596
  %600 = vst [vmem:[%s2] sm:$0xff] %v598
  %601 = vst [vmem:[%s2 + $0x8] sm:$0xff] %v599
  // Predicated region
  $region10: #{forward.1} parent=0 // pred_check
    _
  $region11: #{forward.1} parent=0 // pred_check_branch
    %603 = sbr.rel (0) target = $region13
  $region12: #{forward.1} parent=0 // pred_region
    _
  $region13: #{forward.1} parent=0 // pred_fallthru
    _
  // Predicated region
  $region14: #{forward.1} parent=0 // pred_check
    _
  $region15: #{forward.1} parent=0 // pred_check_branch
    %605 = sbr.rel (0) target = $region17
  $region16: #{forward.1} parent=0 // pred_region
    _
  $region17: #{forward.1} parent=0 // pred_fallthru
    _

</llo_original>
